<compile_context>
chip_gen: v7x
topology: tpu7x:2x2x1
jax: 0.10.0
libtpu: 0.0.40
codegen_flags: <defaults>
</compile_context>

<pallas_src>
import functools

import jax
import jax.numpy as jnp
from jax.experimental import pallas as pl
from jax.experimental.pallas import tpu as pltpu


def _round_up(x, m):
    return ((x + m - 1) // m) * m


# ----------------------------------------------------------------------------
# Shared per-step math (used by both the single-step and grid=(T,) kernels)
# ----------------------------------------------------------------------------
def _decode_step(ids, ctx, h, emb_tbl, w_xe, w_xc, w_hh, w_fch, b_x, b_hn, *, H, gp):
    """One GRU-decoder step.

    ids: (B,1) int32; ctx, h: (B,H) f32; weights in compute dtype (f32/bf16);
    biases f32.  MXU accumulates in f32; all gate elementwise math is f32.
    """
    cdt = w_xe.dtype
    B = ids.shape[0]
    V = emb_tbl.shape[0]

    # In-kernel embedding gather as a one-hot MXU matmul (MXU has huge slack).
    onehot = (ids == jax.lax.broadcasted_iota(jnp.int32, (B, V), 1)).astype(cdt)
    x_emb = jnp.dot(onehot, emb_tbl, preferred_element_type=jnp.float32)      # (B, E)

    # Fused x-side projection: [ GRU input gates (3*gp) | fc_out emb+ctx part (V) ].
    # Issued before the gate chain so the fc partial overlaps EUP gate latency.
    g = (jnp.dot(x_emb.astype(cdt), w_xe, preferred_element_type=jnp.float32)
         + jnp.dot(ctx.astype(cdt), w_xc, preferred_element_type=jnp.float32)
         + b_x)                                                               # (B, 3gp+V)
    gh = jnp.dot(h.astype(cdt), w_hh, preferred_element_type=jnp.float32)     # (B, 3gp)

    gi = g[:, :3 * gp]
    pred_part = g[:, 3 * gp:]

    # Gate slices are 128-lane aligned -> pure vreg views, no XLU rotates.
    # PyTorch GRU gate order: r, z, n.
    r = jax.nn.sigmoid(gi[:, 0:gp] + gh[:, 0:gp])
    z = jax.nn.sigmoid(gi[:, gp:2 * gp] + gh[:, gp:2 * gp])
    n = jnp.tanh(gi[:, 2 * gp:3 * gp] + r * (gh[:, 2 * gp:3 * gp] + b_hn))
    h_new = (1.0 - z[:, :H]) * n[:, :H] + z[:, :H] * h                        # (B, H)

    pred = pred_part + jnp.dot(h_new.astype(cdt), w_fch,
                               preferred_element_type=jnp.float32)            # (B, V)
    return pred, h_new


# ----------------------------------------------------------------------------
# Kernels
# ----------------------------------------------------------------------------
def decoder_step_kernel(ids_ref, ctx_ref, h_ref, emb_ref, w_xe_ref, w_xc_ref,
                        w_hh_ref, w_fch_ref, b_x_ref, b_hn_ref,
                        pred_ref, hnew_ref, *, H, gp):
    pred, h_new = _decode_step(
        ids_ref[...], ctx_ref[...], h_ref[...], emb_ref[...],
        w_xe_ref[...], w_xc_ref[...], w_hh_ref[...], w_fch_ref[...],
        b_x_ref[...], b_hn_ref[...], H=H, gp=gp)
    pred_ref[...] = pred.astype(pred_ref.dtype)
    hnew_ref[...] = h_new.astype(hnew_ref.dtype)


def decoder_seq_kernel(ids_ref, ctx_ref, h0_ref, emb_ref, w_xe_ref, w_xc_ref,
                       w_hh_ref, w_fch_ref, b_x_ref, b_hn_ref,
                       pred_seq_ref, hout_ref, *, H, gp):
    """grid=(T,): weights resident in VMEM, hidden carried in the resident
    output block, per-step logits streamed out lane-dense (B, V)."""
    t = pl.program_id(0)

    @pl.when(t == 0)
    def _():
        hout_ref[...] = h0_ref[...]

    h = hout_ref[...]
    pred, h_new = _decode_step(
        ids_ref[0], ctx_ref[...], h, emb_ref[...],
        w_xe_ref[...], w_xc_ref[...], w_hh_ref[...], w_fch_ref[...],
        b_x_ref[...], b_hn_ref[...], H=H, gp=gp)
    pred_seq_ref[0] = pred.astype(pred_seq_ref.dtype)
    hout_ref[...] = h_new.astype(hout_ref.dtype)


# ----------------------------------------------------------------------------
# Parameters
# ----------------------------------------------------------------------------
def make_decoder_params(key, output_dim, emb_dim, hid_dim):
    """Deterministic params with the same shapes as the PyTorch module."""
    ks = jax.random.split(key, 6)
    E, H, V = emb_dim, hid_dim, output_dim
    scale = 0.1
    return dict(
        embedding=jax.random.normal(ks[0], (V, E), jnp.float32) * scale,
        # nn.GRU: weight_ih_l0 (3H, E+H), weight_hh_l0 (3H, H), biases (3H,),
        # gate order r, z, n.  Input is cat(embedded, context).
        w_ih=jax.random.normal(ks[1], (3 * H, E + H), jnp.float32) * scale,
        w_hh=jax.random.normal(ks[2], (3 * H, H), jnp.float32) * scale,
        b_ih=jax.random.normal(ks[3], (3 * H,), jnp.float32) * scale,
        b_hh=jax.random.normal(ks[4], (3 * H,), jnp.float32) * scale,
        # nn.Linear fc_out: weight (V, E+2H) over cat(emb, hid, ctx), bias (V,)
        w_fc=jax.random.normal(ks[5], (V, E + 2 * H), jnp.float32) * scale,
        b_fc=jnp.zeros((V,), jnp.float32),
    )


def prepack_decoder_params(params, compute_dtype=jnp.bfloat16):
    """One-time repack of PyTorch-layout params into kernel layout.

    Transposes, gate packing, lane-padding to 128-wide gate blocks, bias
    pre-summation and the MXU-dtype cast are all hoisted here.
    """
    emb = params["embedding"]            # (V, E)
    w_ih = params["w_ih"]                # (3H, E+H)
    w_hh = params["w_hh"]                # (3H, H)
    b_ih = params["b_ih"]                # (3H,)
    b_hh = params["b_hh"]                # (3H,)
    w_fc = params["w_fc"]                # (V, E+2H)
    b_fc = params["b_fc"]                # (V,)

    V, E = emb.shape
    H = w_hh.shape[1]
    gp = _round_up(H, 128)               # lane-aligned gate width

    def pad_gates(w_t):                  # (K, 3H) -> (K, 3*gp), gates lane-aligned
        K = w_t.shape[0]
        out = jnp.zeros((K, 3 * gp), jnp.float32)
        for g in range(3):
            out = out.at[:, g * gp:g * gp + H].set(w_t[:, g * H:(g + 1) * H])
        return out

    def pad_gate_vec(v):                 # (3H,) -> (3*gp,)
        out = jnp.zeros((3 * gp,), jnp.float32)
        for g in range(3):
            out = out.at[g * gp:g * gp + H].set(v[g * H:(g + 1) * H])
        return out

    w_ih_t = pad_gates(w_ih.T)           # (E+H, 3gp)
    w_hh_t = pad_gates(w_hh.T)           # (H, 3gp)

    # fc columns: [emb | hid | ctx]
    w_fc_t = w_fc.T                      # (E+2H, V)
    w_fc_e = w_fc_t[:E]                  # (E, V)
    w_fc_h = w_fc_t[E:E + H]             # (H, V)
    w_fc_c = w_fc_t[E + H:]              # (H, V)

    # Fused x-side weights: [GRU input gates | fc emb+ctx part]
    w_xe = jnp.concatenate([w_ih_t[:E], w_fc_e], axis=1)   # (E, 3gp+V)
    w_xc = jnp.concatenate([w_ih_t[E:], w_fc_c], axis=1)   # (H, 3gp+V)

    # Pre-summed biases: r/z thirds get b_i + b_h, n third gets b_in only;
    # b_hn stays separate (needed inside the r * (.) product); b_fc folded in.
    b_rzn = jnp.concatenate([b_ih[:2 * H] + b_hh[:2 * H], b_ih[2 * H:]])
    b_x = jnp.concatenate([pad_gate_vec(b_rzn), b_fc]).reshape(1, 3 * gp + V)
    b_hn = jnp.zeros((gp,), jnp.float32).at[:H].set(b_hh[2 * H:]).reshape(1, gp)

    return dict(
        emb=emb.astype(compute_dtype),           # (V, E)
        w_xe=w_xe.astype(compute_dtype),         # (E, 3gp+V)
        w_xc=w_xc.astype(compute_dtype),         # (H, 3gp+V)
        w_hh=w_hh_t.astype(compute_dtype),       # (H, 3gp)
        w_fch=w_fc_h.astype(compute_dtype),      # (H, V)
        b_x=b_x.astype(jnp.float32),             # (1, 3gp+V)
        b_hn=b_hn.astype(jnp.float32),           # (1, gp)
    )


# ----------------------------------------------------------------------------
# Wrappers
# ----------------------------------------------------------------------------
@jax.jit
def decoder_forward(packed, token_ids, hidden, context):
    """Single decode step (matches the PyTorch forward, eval mode)."""
    B = token_ids.shape[0]
    H = packed["w_hh"].shape[0]
    gp = packed["b_hn"].shape[1]
    V = packed["w_fch"].shape[1]

    ids = token_ids.astype(jnp.int32).reshape(B, 1)
    ctx = context[0]                                # (B, H)
    h = hidden[0]                                   # (B, H)

    vmem = pl.BlockSpec(memory_space=pltpu.MemorySpace.VMEM)
    pred, h_new = pl.pallas_call(
        functools.partial(decoder_step_kernel, H=H, gp=gp),
        out_shape=(
            jax.ShapeDtypeStruct((B, V), jnp.float32),
            jax.ShapeDtypeStruct((B, H), jnp.float32),
        ),
        in_specs=[vmem] * 10,
        out_specs=(vmem, vmem),
        input_output_aliases={2: 1},                # hidden updated in place
    )(ids, ctx, h, packed["emb"], packed["w_xe"], packed["w_xc"],
      packed["w_hh"], packed["w_fch"], packed["b_x"], packed["b_hn"])
    return pred, h_new[None]                        # (B, V), (1, B, H)


@jax.jit
def decoder_forward_seq(packed, token_seq, hidden, context):
    """T teacher-forced decode steps in ONE pallas_call (grid=(T,)).

    Equivalent to calling `decoder_forward` T times with token_seq[t], but
    weights stay VMEM-resident and the hidden state never round-trips HBM.
    """
    T, B = token_seq.shape
    H = packed["w_hh"].shape[0]
    gp = packed["b_hn"].shape[1]
    V = packed["w_fch"].shape[1]
    E = packed["w_xe"].shape[0]

    ids = token_seq.astype(jnp.int32).reshape(T, B, 1)
    ctx = context[0]
    h0 = hidden[0]

    def const(shape):
        return pl.BlockSpec(shape, lambda t: (0,) * len(shape))

    pred_seq, h_final = pl.pallas_call(
        functools.partial(decoder_seq_kernel, H=H, gp=gp),
        grid=(T,),
        out_shape=(
            jax.ShapeDtypeStruct((T, B, V), jnp.float32),
            jax.ShapeDtypeStruct((B, H), jnp.float32),
        ),
        in_specs=[
            pl.BlockSpec((1, B, 1), lambda t: (t, 0, 0)),   # per-step token ids
            const((B, H)),                                  # context (resident)
            const((B, H)),                                  # initial hidden
            const((V, E)),                                  # embedding table (resident)
            const((E, 3 * gp + V)),                         # w_xe (resident)
            const((H, 3 * gp + V)),                         # w_xc (resident)
            const((H, 3 * gp)),                             # w_hh (resident)
            const((H, V)),                                  # w_fch (resident)
            const((1, 3 * gp + V)),                         # b_x
            const((1, gp)),                                 # b_hn
        ],
        out_specs=(
            pl.BlockSpec((1, B, V), lambda t: (t, 0, 0)),   # per-step logits
            const((B, H)),                                  # hidden carry / final
        ),
        input_output_aliases={2: 1},                        # h0 buffer reused for h_final
        compiler_params=pltpu.CompilerParams(
            dimension_semantics=("arbitrary",)),            # sequential carry over t
    )(ids, ctx, h0, packed["emb"], packed["w_xe"], packed["w_xc"],
      packed["w_hh"], packed["w_fch"], packed["b_x"], packed["b_hn"])
    return pred_seq, h_final[None]                          # (T, B, V), (1, B, H)


# ----------------------------------------------------------------------------
# Pure-JAX references (mirror the PyTorch forward, eval mode)
# ----------------------------------------------------------------------------
def decoder_forward_ref(params, token_ids, hidden, context, emb_dim, hid_dim):
    E, H = emb_dim, hid_dim
    x_emb = jnp.take(params["embedding"], token_ids, axis=0)
    ctx = context[0]
    h = hidden[0]
    x_in = jnp.concatenate([x_emb, ctx], axis=1)
    gi = x_in @ params["w_ih"].T + params["b_ih"]
    gh = h @ params["w_hh"].T + params["b_hh"]
    r = jax.nn.sigmoid(gi[:, :H] + gh[:, :H])
    z = jax.nn.sigmoid(gi[:, H:2 * H] + gh[:, H:2 * H])
    n = jnp.tanh(gi[:, 2 * H:] + r * gh[:, 2 * H:])
    h_new = (1.0 - z) * n + z * h
    out = jnp.concatenate([x_emb, h_new, ctx], axis=1)
    pred = out @ params["w_fc"].T + params["b_fc"]
    return pred, h_new[None]


def decoder_forward_seq_ref(params, token_seq, hidden, context, emb_dim, hid_dim):
    preds = []
    h = hidden
    for t in range(token_seq.shape[0]):
        p, h = decoder_forward_ref(params, token_seq[t], h, context, emb_dim, hid_dim)
        preds.append(p)
    return jnp.stack(preds, axis=0), h


# ----------------------------------------------------------------------------
if __name__ == "__main__":
    B = 8          # batch
    E = 32         # emb_dim
    H = 32         # hid_dim
    V = 128        # output_dim (vocab)
    T = 6          # decode steps for the fused-loop version

    key = jax.random.PRNGKey(0)
    kp, kt, ks, kh, kc = jax.random.split(key, 5)
    params = make_decoder_params(kp, V, E, H)

    token_ids = jax.random.randint(kt, (B,), 0, V, dtype=jnp.int32)
    token_seq = jax.random.randint(ks, (T, B), 0, V, dtype=jnp.int32)
    hidden = jax.random.normal(kh, (1, B, H), jnp.float32)
    context = jax.random.normal(kc, (1, B, H), jnp.float32)

    pred_ref, h_ref = decoder_forward_ref(params, token_ids, hidden, context, E, H)
    pred_seq_ref, h_seq_ref = decoder_forward_seq_ref(params, token_seq, hidden,
                                                      context, E, H)

    # --- f32 MXU path: matches the f32 reference tightly ---
    packed_f32 = prepack_decoder_params(params, jnp.float32)
    pred32, h32 = decoder_forward(packed_f32, token_ids, hidden, context)
    jax.block_until_ready((pred32, h32))
    assert pred32.shape == (B, V) and h32.shape == (1, B, H)
    assert jnp.allclose(pred32, pred_ref, atol=1e-4, rtol=1e-4)
    assert jnp.allclose(h32, h_ref, atol=1e-4, rtol=1e-4)

    seq32, hseq32 = decoder_forward_seq(packed_f32, token_seq, hidden, context)
    jax.block_until_ready((seq32, hseq32))
    assert seq32.shape == (T, B, V) and hseq32.shape == (1, B, H)
    assert jnp.allclose(seq32, pred_seq_ref, atol=1e-4, rtol=1e-4)
    assert jnp.allclose(hseq32, h_seq_ref, atol=1e-4, rtol=1e-4)

    # --- bf16 MXU-operand path (default; f32 accumulate, f32 gate math) ---
    packed_bf16 = prepack_decoder_params(params)          # bf16 by default
    pred16, h16 = decoder_forward(packed_bf16, token_ids, hidden, context)
    seq16, hseq16 = decoder_forward_seq(packed_bf16, token_seq, hidden, context)
    jax.block_until_ready((pred16, h16, seq16, hseq16))
    assert jnp.allclose(pred16, pred_ref, atol=5e-2, rtol=5e-2)
    assert jnp.allclose(h16, h_ref, atol=5e-2, rtol=5e-2)
    assert jnp.allclose(seq16, pred_seq_ref, atol=1e-1, rtol=1e-1)
    assert jnp.allclose(hseq16, h_seq_ref, atol=1e-1, rtol=1e-1)

    print("KERNEL_OK")
</pallas_src>

<mosaic_0001>
module attributes {stable_mosaic.version = 11 : i64} {
  func.func @decoder_step_kernel(%arg0: memref<8x1xi32, #tpu.memory_space<vmem>>, %arg1: memref<8x32xf32, #tpu.memory_space<vmem>>, %arg2: memref<8x32xf32, #tpu.memory_space<vmem>>, %arg3: memref<128x32xf32, #tpu.memory_space<vmem>>, %arg4: memref<32x512xf32, #tpu.memory_space<vmem>>, %arg5: memref<32x512xf32, #tpu.memory_space<vmem>>, %arg6: memref<32x384xf32, #tpu.memory_space<vmem>>, %arg7: memref<32x128xf32, #tpu.memory_space<vmem>>, %arg8: memref<1x512xf32, #tpu.memory_space<vmem>>, %arg9: memref<1x128xf32, #tpu.memory_space<vmem>>, %arg10: memref<8x128xf32, #tpu.memory_space<vmem>>, %arg11: memref<8x32xf32, #tpu.memory_space<vmem>>) attributes {dimension_semantics = [], scalar_prefetch = 0 : i64, scratch_operands = 0 : i64, tpu.core_type = #tpu.core_type<tc>} {
    %c0 = arith.constant 0 : index
    %c0_0 = arith.constant 0 : index
    %0 = vector.load %arg0[%c0, %c0_0] : memref<8x1xi32, #tpu.memory_space<vmem>>, vector<8x1xi32>
    %c0_1 = arith.constant 0 : index
    %c0_2 = arith.constant 0 : index
    %1 = vector.load %arg1[%c0_1, %c0_2] : memref<8x32xf32, #tpu.memory_space<vmem>>, vector<8x32xf32>
    %c0_3 = arith.constant 0 : index
    %c0_4 = arith.constant 0 : index
    %2 = vector.load %arg2[%c0_3, %c0_4] : memref<8x32xf32, #tpu.memory_space<vmem>>, vector<8x32xf32>
    %c0_5 = arith.constant 0 : index
    %c0_6 = arith.constant 0 : index
    %3 = vector.load %arg3[%c0_5, %c0_6] : memref<128x32xf32, #tpu.memory_space<vmem>>, vector<128x32xf32>
    %c0_7 = arith.constant 0 : index
    %c0_8 = arith.constant 0 : index
    %4 = vector.load %arg4[%c0_7, %c0_8] : memref<32x512xf32, #tpu.memory_space<vmem>>, vector<32x512xf32>
    %c0_9 = arith.constant 0 : index
    %c0_10 = arith.constant 0 : index
    %5 = vector.load %arg5[%c0_9, %c0_10] : memref<32x512xf32, #tpu.memory_space<vmem>>, vector<32x512xf32>
    %c0_11 = arith.constant 0 : index
    %c0_12 = arith.constant 0 : index
    %6 = vector.load %arg6[%c0_11, %c0_12] : memref<32x384xf32, #tpu.memory_space<vmem>>, vector<32x384xf32>
    %c0_13 = arith.constant 0 : index
    %c0_14 = arith.constant 0 : index
    %7 = vector.load %arg7[%c0_13, %c0_14] : memref<32x128xf32, #tpu.memory_space<vmem>>, vector<32x128xf32>
    %c0_15 = arith.constant 0 : index
    %c0_16 = arith.constant 0 : index
    %8 = vector.load %arg8[%c0_15, %c0_16] : memref<1x512xf32, #tpu.memory_space<vmem>>, vector<1x512xf32>
    %c0_17 = arith.constant 0 : index
    %c0_18 = arith.constant 0 : index
    %9 = vector.load %arg9[%c0_17, %c0_18] : memref<1x128xf32, #tpu.memory_space<vmem>>, vector<1x128xf32>
    %10 = tpu.iota {dimensions = array<i32: 1>} : vector<8x128xi32>
    %11 = vector.broadcast %0 : vector<8x1xi32> to vector<8x128xi32>
    %12 = arith.cmpi eq, %11, %10 : vector<8x128xi32>
    %13 = arith.extui %12 : vector<8x128xi1> to vector<8x128xi32>
    %14 = arith.sitofp %13 : vector<8x128xi32> to vector<8x128xf32>
    %cst = arith.constant dense<0.000000e+00> : vector<8x32xf32>
    %15 = tpu.matmul %14, %3, %cst {dimension_numbers = #tpu.dot_dimension_numbers<[1], [0], [0], [1], [0, 0, 1, 1], [], []>} : vector<8x128xf32>, vector<128x32xf32>, vector<8x32xf32> -> vector<8x32xf32>
    %cst_19 = arith.constant dense<0.000000e+00> : vector<8x512xf32>
    %16 = tpu.matmul %15, %4, %cst_19 {dimension_numbers = #tpu.dot_dimension_numbers<[1], [0], [0], [1], [0, 0, 1, 1], [], []>} : vector<8x32xf32>, vector<32x512xf32>, vector<8x512xf32> -> vector<8x512xf32>
    %cst_20 = arith.constant dense<0.000000e+00> : vector<8x512xf32>
    %17 = tpu.matmul %1, %5, %cst_20 {dimension_numbers = #tpu.dot_dimension_numbers<[1], [0], [0], [1], [0, 0, 1, 1], [], []>} : vector<8x32xf32>, vector<32x512xf32>, vector<8x512xf32> -> vector<8x512xf32>
    %18 = arith.addf %16, %17 : vector<8x512xf32>
    %19 = vector.broadcast %8 : vector<1x512xf32> to vector<8x512xf32>
    %20 = arith.addf %18, %19 : vector<8x512xf32>
    %cst_21 = arith.constant dense<0.000000e+00> : vector<8x384xf32>
    %21 = tpu.matmul %2, %6, %cst_21 {dimension_numbers = #tpu.dot_dimension_numbers<[1], [0], [0], [1], [0, 0, 1, 1], [], []>} : vector<8x32xf32>, vector<32x384xf32>, vector<8x384xf32> -> vector<8x384xf32>
    %22 = vector.extract_strided_slice %20 {offsets = [0, 0], sizes = [8, 384], strides = [1, 1]} : vector<8x512xf32> to vector<8x384xf32>
    %23 = vector.extract_strided_slice %20 {offsets = [0, 384], sizes = [8, 128], strides = [1, 1]} : vector<8x512xf32> to vector<8x128xf32>
    %24 = vector.extract_strided_slice %22 {offsets = [0, 0], sizes = [8, 128], strides = [1, 1]} : vector<8x384xf32> to vector<8x128xf32>
    %25 = vector.extract_strided_slice %21 {offsets = [0, 0], sizes = [8, 128], strides = [1, 1]} : vector<8x384xf32> to vector<8x128xf32>
    %26 = arith.addf %24, %25 : vector<8x128xf32>
    %27 = arith.negf %26 : vector<8x128xf32>
    %28 = math.exp %27 : vector<8x128xf32>
    %cst_22 = arith.constant 1.000000e+00 : f32
    %29 = vector.broadcast %cst_22 : f32 to vector<8x128xf32>
    %30 = arith.addf %29, %28 : vector<8x128xf32>
    %31 = arith.divf %29, %30 : vector<8x128xf32>
    %32 = vector.extract_strided_slice %22 {offsets = [0, 128], sizes = [8, 128], strides = [1, 1]} : vector<8x384xf32> to vector<8x128xf32>
    %33 = vector.extract_strided_slice %21 {offsets = [0, 128], sizes = [8, 128], strides = [1, 1]} : vector<8x384xf32> to vector<8x128xf32>
    %34 = arith.addf %32, %33 : vector<8x128xf32>
    %35 = arith.negf %34 : vector<8x128xf32>
    %36 = math.exp %35 : vector<8x128xf32>
    %cst_23 = arith.constant 1.000000e+00 : f32
    %37 = vector.broadcast %cst_23 : f32 to vector<8x128xf32>
    %38 = arith.addf %37, %36 : vector<8x128xf32>
    %39 = arith.divf %37, %38 : vector<8x128xf32>
    %40 = vector.extract_strided_slice %22 {offsets = [0, 256], sizes = [8, 128], strides = [1, 1]} : vector<8x384xf32> to vector<8x128xf32>
    %41 = vector.extract_strided_slice %21 {offsets = [0, 256], sizes = [8, 128], strides = [1, 1]} : vector<8x384xf32> to vector<8x128xf32>
    %42 = vector.broadcast %9 : vector<1x128xf32> to vector<8x128xf32>
    %43 = arith.addf %41, %42 : vector<8x128xf32>
    %44 = arith.mulf %31, %43 : vector<8x128xf32>
    %45 = arith.addf %40, %44 : vector<8x128xf32>
    %46 = math.tanh %45 : vector<8x128xf32>
    %47 = vector.extract_strided_slice %39 {offsets = [0, 0], sizes = [8, 32], strides = [1, 1]} : vector<8x128xf32> to vector<8x32xf32>
    %cst_24 = arith.constant 1.000000e+00 : f32
    %48 = vector.broadcast %cst_24 : f32 to vector<8x32xf32>
    %49 = arith.subf %48, %47 : vector<8x32xf32>
    %50 = vector.extract_strided_slice %46 {offsets = [0, 0], sizes = [8, 32], strides = [1, 1]} : vector<8x128xf32> to vector<8x32xf32>
    %51 = arith.mulf %49, %50 : vector<8x32xf32>
    %52 = vector.extract_strided_slice %39 {offsets = [0, 0], sizes = [8, 32], strides = [1, 1]} : vector<8x128xf32> to vector<8x32xf32>
    %53 = arith.mulf %52, %2 : vector<8x32xf32>
    %54 = arith.addf %51, %53 : vector<8x32xf32>
    %cst_25 = arith.constant dense<0.000000e+00> : vector<8x128xf32>
    %55 = tpu.matmul %54, %7, %cst_25 {dimension_numbers = #tpu.dot_dimension_numbers<[1], [0], [0], [1], [0, 0, 1, 1], [], []>} : vector<8x32xf32>, vector<32x128xf32>, vector<8x128xf32> -> vector<8x128xf32>
    %56 = arith.addf %23, %55 : vector<8x128xf32>
    %c0_26 = arith.constant 0 : index
    %c0_27 = arith.constant 0 : index
    %57 = vector.load %arg10[%c0_26, %c0_27] : memref<8x128xf32, #tpu.memory_space<vmem>>, vector<8x128xf32>
    tpu.vector_store %arg10[%c0_26, %c0_27], %56 {strides = array<i32>} : memref<8x128xf32, #tpu.memory_space<vmem>>, vector<8x128xf32>,
    %c0_28 = arith.constant 0 : index
    %c0_29 = arith.constant 0 : index
    %58 = vector.load %arg11[%c0_28, %c0_29] : memref<8x32xf32, #tpu.memory_space<vmem>>, vector<8x32xf32>
    tpu.vector_store %arg11[%c0_28, %c0_29], %54 {strides = array<i32>} : memref<8x32xf32, #tpu.memory_space<vmem>>, vector<8x32xf32>,
    return
  }
}

</mosaic_0001>

<llo_original>
// kernel: decoder_forward.1
$region0: #{decoder_forward.1}
  #allocation0 [shape = 'u32[]', space=smem, size = 0x4, offset = 0x4, fixed_abs, tag = 'smem constant byte address 0x4 - core index']
  #allocation1 [shape = 'u32[144,128]{1,0:T(1,128)}', space=vmem, size = 0x12000, scoped, tag = 'internal scratch']
  %s0 = inlined_call_operand.vmem [shape: s32[8,1], index: 0, kind: input, shape index: {}]
  %s1 = inlined_call_operand.vmem [shape: f32[8,32], index: 1, kind: input, shape index: {}]
  %s2 = inlined_call_operand.vmem [shape: f32[8,32], index: 2, kind: input, shape index: {}, may-alias: {2,11}]
  %s3 = inlined_call_operand.vmem [shape: f32[128,32], index: 3, kind: input, shape index: {}]
  %s4 = inlined_call_operand.vmem [shape: f32[32,512], index: 4, kind: input, shape index: {}]
  %s5 = inlined_call_operand.hbm [shape: f32[32,512], index: 5, kind: input, shape index: {}]
  %s6 = inlined_call_operand.hbm [shape: f32[32,384], index: 6, kind: input, shape index: {}]
  %s7 = inlined_call_operand.vmem [shape: f32[32,128], index: 7, kind: input, shape index: {}]
  %s8 = inlined_call_operand.vmem [shape: f32[1,512], index: 8, kind: input, shape index: {}]
  %s9 = inlined_call_operand.vmem [shape: f32[1,128], index: 9, kind: input, shape index: {}]
  %s10 = inlined_call_operand.hbm [shape: f32[8,128], index: 10, kind: output, shape index: {0}]
  %s11 = inlined_call_operand.vmem [shape: f32[8,32], index: 11, kind: output, shape index: {1}, may-alias: {2,11}]
  %12 = xla_tuple %s10, %s11
  %s13 = sld [smem:[#allocation0]]
  $region66: #{decoder_forward.1} parent=0
    _
  %s15 = ssub.s32 1, %s13
  %s16 = scalar_select 0, %s15, %s13
  $region1: #{decoder_forward.1} parent=0
    #allocation2 [shape = 'u8[65536]{0}', space=vmem, size = 0x10000, scoped, tag = 'input window, operand 5, single buffered']
    #allocation3 [shape = 's32[1]{0}', space=sflag, size = 0x4, scoped, tag = 'scoped memory for decoder_forward.1']
    #allocation4 [shape = 's32[1]{0}', space=sflag, size = 0x4, scoped, tag = 'scoped memory for decoder_forward.1']
    #allocation5 [shape = 'u8[49152]{0}', space=vmem, size = 0xc000, scoped, tag = 'input window, operand 6, single buffered']
    #allocation6 [shape = 's32[1]{0}', space=sflag, size = 0x4, scoped, tag = 'scoped memory for decoder_forward.1']
    #allocation7 [shape = 'u8[4096]{0}', space=vmem, size = 0x1000, scoped, tag = 'output window, operand 0, single buffered']
    %17 = vsyncpa [#allocation3], 0
    %18 = vsyncpa [#allocation6], 0
    %19 = vsyncpa [#allocation4], 0
    // Predicated region
    $region2: #{decoder_forward.1} parent=1 // pred_check
      _
    $region3: #{decoder_forward.1} parent=1 // pred_check_branch
      %21 = sbr.rel (0) target = $region5
    $region4: #{decoder_forward.1} parent=1 // pred_region
      _
    $region5: #{decoder_forward.1} parent=1 // pred_fallthru
      _
    // Predicated region
    $region6: #{decoder_forward.1} parent=1 // pred_check
      _
    $region7: #{decoder_forward.1} parent=1 // pred_check_branch
      %23 = sbr.rel (0) target = $region9
    $region8: #{decoder_forward.1} parent=1 // pred_region
      _
    $region9: #{decoder_forward.1} parent=1 // pred_fallthru
      _
    // Predicated region
    $region10: #{decoder_forward.1} parent=1 // pred_check
      _
    $region11: #{decoder_forward.1} parent=1 // pred_check_branch
      %25 = sbr.rel (0) target = $region13
    $region12: #{decoder_forward.1} parent=1 // pred_region
      _
    $region13: #{decoder_forward.1} parent=1 // pred_fallthru
      _
    // Predicated region
    $region14: #{decoder_forward.1} parent=1 // pred_check
      _
    $region15: #{decoder_forward.1} parent=1 // pred_check_branch
      %27 = sbr.rel (0) target = $region17
    $region16: #{decoder_forward.1} parent=1 // pred_region
      _
    $region17: #{decoder_forward.1} parent=1 // pred_fallthru
      _
    // Predicated region
    $region18: #{decoder_forward.1} parent=1 // pred_check
      _
    $region19: #{decoder_forward.1} parent=1 // pred_check_branch
      %29 = sbr.rel (0) target = $region21
    $region20: #{decoder_forward.1} parent=1 // pred_region
      _
    $region21: #{decoder_forward.1} parent=1 // pred_fallthru
      _
    // Predicated region
    $region22: #{decoder_forward.1} parent=1 // pred_check
      _
    $region23: #{decoder_forward.1} parent=1 // pred_check_branch
      %31 = sbr.rel (0) target = $region25
    $region24: #{decoder_forward.1} parent=1 // pred_region
      %s33 = ssub.s32 2048, 2048
      %34 = vsyncadd [#allocation3], %s33
      %s35 = sshll.u32 [#allocation2], 4
      %s36 = int_to_ptr.vmem [resolvable:$true] %s35
      %41 = dma.hbm_to_vmem [thread:$0]  %s5, 2048, %s36, [#allocation3], 512, 512, 32
    $region25: #{decoder_forward.1} parent=1 // pred_fallthru
      _
    // Predicated region
    $region26: #{decoder_forward.1} parent=1 // pred_check
      _
    $region27: #{decoder_forward.1} parent=1 // pred_check_branch
      %43 = sbr.rel (0) target = $region29
    $region28: #{decoder_forward.1} parent=1 // pred_region
      %s45 = ssub.s32 1536, 1536
      %46 = vsyncadd [#allocation6], %s45
      %s47 = sshll.u32 [#allocation5], 4
      %s48 = int_to_ptr.vmem [resolvable:$true] %s47
      %53 = dma.hbm_to_vmem [thread:$0]  %s6, 1536, %s48, [#allocation6], 384, 384, 24
    $region29: #{decoder_forward.1} parent=1 // pred_fallthru
      _
    // Predicated region
    $region30: #{decoder_forward.1} parent=1 // pred_check
      _
    $region31: #{decoder_forward.1} parent=1 // pred_check_branch
      %55 = sbr.rel (0) target = $region33
    $region32: #{decoder_forward.1} parent=1 // pred_region
      _
    $region33: #{decoder_forward.1} parent=1 // pred_fallthru
      _
    // Predicated region
    $region34: #{decoder_forward.1} parent=1 // pred_check
      _
    $region35: #{decoder_forward.1} parent=1 // pred_check_branch
      %57 = sbr.rel (0) target = $region37
    $region36: #{decoder_forward.1} parent=1 // pred_region
      _
    $region37: #{decoder_forward.1} parent=1 // pred_fallthru
      _
    // Predicated region
    $region38: #{decoder_forward.1} parent=1 // pred_check
      _
    $region39: #{decoder_forward.1} parent=1 // pred_check_branch
      %59 = sbr.rel (0) target = $region41
    $region40: #{decoder_forward.1} parent=1 // pred_region
      _
    $region41: #{decoder_forward.1} parent=1 // pred_fallthru
      _
    // Predicated region
    $region42: #{decoder_forward.1} parent=1 // pred_check
      _
    $region43: #{decoder_forward.1} parent=1 // pred_check_branch
      %61 = sbr.rel (0) target = $region45
    $region44: #{decoder_forward.1} parent=1 // pred_region
      %62 = dma.done [#allocation3], 2048
    $region45: #{decoder_forward.1} parent=1 // pred_fallthru
      _
    // Predicated region
    $region46: #{decoder_forward.1} parent=1 // pred_check
      _
    $region47: #{decoder_forward.1} parent=1 // pred_check_branch
      %64 = sbr.rel (0) target = $region49
    $region48: #{decoder_forward.1} parent=1 // pred_region
      %65 = dma.done [#allocation6], 1536
    $region49: #{decoder_forward.1} parent=1 // pred_fallthru
      _
    %v66 = vld [vmem:[%s0] sm:$0xff]
    %v67 = vld [vmem:[%s1] sm:$0xff]
    %v68 = vld [vmem:[%s2] sm:$0xff]
    %v69 = vld [vmem:[%s3] sm:$0xff]
    %v70 = vld [vmem:[%s3 + $0x8] sm:$0xff]
    %v71 = vld [vmem:[%s3 + $0x10] sm:$0xff]
    %v72 = vld [vmem:[%s3 + $0x18] sm:$0xff]
    %v73 = vld [vmem:[%s3 + $0x20] sm:$0xff]
    %v74 = vld [vmem:[%s3 + $0x28] sm:$0xff]
    %v75 = vld [vmem:[%s3 + $0x30] sm:$0xff]
    %v76 = vld [vmem:[%s3 + $0x38] sm:$0xff]
    %v77 = vld [vmem:[%s3 + $0x40] sm:$0xff]
    %v78 = vld [vmem:[%s3 + $0x48] sm:$0xff]
    %v79 = vld [vmem:[%s3 + $0x50] sm:$0xff]
    %v80 = vld [vmem:[%s3 + $0x58] sm:$0xff]
    %v81 = vld [vmem:[%s3 + $0x60] sm:$0xff]
    %v82 = vld [vmem:[%s3 + $0x68] sm:$0xff]
    %v83 = vld [vmem:[%s3 + $0x70] sm:$0xff]
    %v84 = vld [vmem:[%s3 + $0x78] sm:$0xff]
    %v85 = vld [vmem:[%s4] sm:$0xff]
    %v86 = vld [vmem:[%s4 + $0x8] sm:$0xff]
    %v87 = vld [vmem:[%s4 + $0x10] sm:$0xff]
    %v88 = vld [vmem:[%s4 + $0x18] sm:$0xff]
    %v89 = vld [vmem:[%s4 + $0x20] sm:$0xff]
    %v90 = vld [vmem:[%s4 + $0x28] sm:$0xff]
    %v91 = vld [vmem:[%s4 + $0x30] sm:$0xff]
    %v92 = vld [vmem:[%s4 + $0x38] sm:$0xff]
    %v93 = vld [vmem:[%s4 + $0x40] sm:$0xff]
    %v94 = vld [vmem:[%s4 + $0x48] sm:$0xff]
    %v95 = vld [vmem:[%s4 + $0x50] sm:$0xff]
    %v96 = vld [vmem:[%s4 + $0x58] sm:$0xff]
    %v97 = vld [vmem:[%s4 + $0x60] sm:$0xff]
    %v98 = vld [vmem:[%s4 + $0x68] sm:$0xff]
    %v99 = vld [vmem:[%s4 + $0x70] sm:$0xff]
    %v100 = vld [vmem:[%s4 + $0x78] sm:$0xff]
    %v101 = vld [vmem:[#allocation2] sm:$0xff]
    %v102 = vld [vmem:[#allocation2 + $0x8] sm:$0xff]
    %v103 = vld [vmem:[#allocation2 + $0x10] sm:$0xff]
    %v104 = vld [vmem:[#allocation2 + $0x18] sm:$0xff]
    %v105 = vld [vmem:[#allocation2 + $0x20] sm:$0xff]
    %v106 = vld [vmem:[#allocation2 + $0x28] sm:$0xff]
    %v107 = vld [vmem:[#allocation2 + $0x30] sm:$0xff]
    %v108 = vld [vmem:[#allocation2 + $0x38] sm:$0xff]
    %v109 = vld [vmem:[#allocation2 + $0x40] sm:$0xff]
    %v110 = vld [vmem:[#allocation2 + $0x48] sm:$0xff]
    %v111 = vld [vmem:[#allocation2 + $0x50] sm:$0xff]
    %v112 = vld [vmem:[#allocation2 + $0x58] sm:$0xff]
    %v113 = vld [vmem:[#allocation2 + $0x60] sm:$0xff]
    %v114 = vld [vmem:[#allocation2 + $0x68] sm:$0xff]
    %v115 = vld [vmem:[#allocation2 + $0x70] sm:$0xff]
    %v116 = vld [vmem:[#allocation2 + $0x78] sm:$0xff]
    %v117 = vld [vmem:[#allocation5] sm:$0xff]
    %v118 = vld [vmem:[#allocation5 + $0x8] sm:$0xff]
    %v119 = vld [vmem:[#allocation5 + $0x10] sm:$0xff]
    %v120 = vld [vmem:[#allocation5 + $0x18] sm:$0xff]
    %v121 = vld [vmem:[#allocation5 + $0x20] sm:$0xff]
    %v122 = vld [vmem:[#allocation5 + $0x28] sm:$0xff]
    %v123 = vld [vmem:[#allocation5 + $0x30] sm:$0xff]
    %v124 = vld [vmem:[#allocation5 + $0x38] sm:$0xff]
    %v125 = vld [vmem:[#allocation5 + $0x40] sm:$0xff]
    %v126 = vld [vmem:[#allocation5 + $0x48] sm:$0xff]
    %v127 = vld [vmem:[#allocation5 + $0x50] sm:$0xff]
    %v128 = vld [vmem:[#allocation5 + $0x58] sm:$0xff]
    %v129 = vld [vmem:[%s7] sm:$0xff]
    %v130 = vld [vmem:[%s7 + $0x8] sm:$0xff]
    %v131 = vld [vmem:[%s7 + $0x10] sm:$0xff]
    %v132 = vld [vmem:[%s7 + $0x18] sm:$0xff]
    %v133 = vld [vmem:[%s8] sm:$0xf]
    %v134 = vld [vmem:[%s9] sm:$0x1]
    %v135 = vlaneseq
    %v136 = vand.u32 %v135, 127
    %137 = vset.pattern.permute.xlu0 0
    %138 = vperm.xlu0 %137, %v66
    %v139 = vpop.permute.xlu0 %138
    %vm140 = vcmp.eq.s32.totalorder %v139, %v136
    %v141 = vsel %vm140, 1, 0
    %v142 = vcvt.s32.f32 %v141
    %143 = vmatprep.subr.mxu0 0.0
    %144 = vmatpush1.msra.mxu0 %v69
    %145 = vmatprep.subr.mxu0 0.0
    %146 = vmatpush1.msra.mxu0 %v70
    %147 = vmatprep.subr.mxu0 0.0
    %148 = vmatpush1.msra.mxu0 %v71
    %149 = vmatprep.subr.mxu0 0.0
    %150 = vmatpush1.msra.mxu0 %v72
    %151 = vmatprep.subr.mxu0 0.0
    %152 = vmatpush1.msra.mxu0 %v73
    %153 = vmatprep.subr.mxu0 0.0
    %154 = vmatpush1.msra.mxu0 %v74
    %155 = vmatprep.subr.mxu0 0.0
    %156 = vmatpush1.msra.mxu0 %v75
    %157 = vmatprep.subr.mxu0 0.0
    %158 = vmatpush1.msra.mxu0 %v76
    %159 = vmatprep.subr.mxu0 0.0
    %160 = vmatpush1.msra.mxu0 %v77
    %161 = vmatprep.subr.mxu0 0.0
    %162 = vmatpush1.msra.mxu0 %v78
    %163 = vmatprep.subr.mxu0 0.0
    %164 = vmatpush1.msra.mxu0 %v79
    %165 = vmatprep.subr.mxu0 0.0
    %166 = vmatpush1.msra.mxu0 %v80
    %167 = vmatprep.subr.mxu0 0.0
    %168 = vmatpush1.msra.mxu0 %v81
    %169 = vmatprep.subr.mxu0 0.0
    %170 = vmatpush1.msra.mxu0 %v82
    %171 = vmatprep.subr.mxu0 0.0
    %172 = vmatpush1.msra.mxu0 %v83
    %173 = vmatprep.subr.mxu0 0.0
    %174 = vmatpush1.msra.mxu0 %v84
    %175 = vmatprep.subr.mxu0 0.0
    %176 = vmatpush1.msra.mxu0 0.0
    %177 = vmatprep.subr.mxu0 0.0
    %178 = vmatpush1.msra.mxu0 0.0
    %179 = vmatprep.subr.mxu0 0.0
    %180 = vmatpush1.msra.mxu0 0.0
    %181 = vmatprep.subr.mxu0 0.0
    %182 = vmatpush1.msra.mxu0 0.0
    %183 = vmatprep.subr.mxu0 0.0
    %184 = vmatpush1.msra.mxu0 0.0
    %185 = vmatprep.subr.mxu0 0.0
    %186 = vmatpush1.msra.mxu0 0.0
    %187 = vmatprep.subr.mxu0 0.0
    %188 = vmatpush1.msra.mxu0 0.0
    %189 = vmatprep.subr.mxu0 0.0
    %190 = vmatpush1.msra.mxu0 0.0
    %191 = vmatprep.subr.mxu0 0.0
    %192 = vmatpush1.msra.mxu0 0.0
    %193 = vmatprep.subr.mxu0 0.0
    %194 = vmatpush1.msra.mxu0 0.0
    %195 = vmatprep.subr.mxu0 0.0
    %196 = vmatpush1.msra.mxu0 0.0
    %197 = vmatprep.subr.mxu0 0.0
    %198 = vmatpush1.msra.mxu0 0.0
    %199 = vmatprep.subr.mxu0 0.0
    %200 = vmatpush1.msra.mxu0 0.0
    %201 = vmatprep.subr.mxu0 0.0
    %202 = vmatpush1.msra.mxu0 0.0
    %203 = vmatprep.subr.mxu0 0.0
    %204 = vmatpush1.msra.mxu0 0.0
    %205 = vmatprep.subr.mxu0 0.0
    %206 = vmatpush1.msra.mxu0 0.0
    %207 = vmatprep.mubr.f32.mxu0 0.0
    %208 = vmatmul.mubr.f32.gmra.mrb[0].mxu0 %v142
    %v209 = vpop.f32.mrb[0].mxu0
    %v210 = vadd.f32 0.0, %v209
    %v211 = vpop.f32.mrb[0].mxu0
    %212 = vdwg.mxu0
    %vm213 = vcmask 261120
    %v215 = vsel %vm213, %v67, 0
    %217 = vmatprep.subr.mxu0 %v102
    %218 = vmatpush1.msra.mxu0 %v101
    %219 = vmatprep.subr.mxu0 %v106
    %220 = vmatpush1.msra.mxu0 %v105
    %221 = vmatprep.subr.mxu0 %v110
    %222 = vmatpush1.msra.mxu0 %v109
    %223 = vmatprep.subr.mxu0 %v114
    %224 = vmatpush1.msra.mxu0 %v113
    %225 = vmatprep.subr.mxu0 0.0
    %226 = vmatpush1.msra.mxu0 0.0
    %227 = vmatprep.subr.mxu0 0.0
    %228 = vmatpush1.msra.mxu0 0.0
    %229 = vmatprep.subr.mxu0 0.0
    %230 = vmatpush1.msra.mxu0 0.0
    %231 = vmatprep.subr.mxu0 0.0
    %232 = vmatpush1.msra.mxu0 0.0
    %233 = vmatprep.subr.mxu0 0.0
    %234 = vmatpush1.msra.mxu0 0.0
    %235 = vmatprep.subr.mxu0 0.0
    %236 = vmatpush1.msra.mxu0 0.0
    %237 = vmatprep.subr.mxu0 0.0
    %238 = vmatpush1.msra.mxu0 0.0
    %239 = vmatprep.subr.mxu0 0.0
    %240 = vmatpush1.msra.mxu0 0.0
    %241 = vmatprep.subr.mxu0 0.0
    %242 = vmatpush1.msra.mxu0 0.0
    %243 = vmatprep.subr.mxu0 0.0
    %244 = vmatpush1.msra.mxu0 0.0
    %245 = vmatprep.subr.mxu0 0.0
    %246 = vmatpush1.msra.mxu0 0.0
    %247 = vmatprep.subr.mxu0 0.0
    %248 = vmatpush1.msra.mxu0 0.0
    %249 = vmatprep.subr.mxu0 0.0
    %250 = vmatpush1.msra.mxu0 0.0
    %251 = vmatprep.subr.mxu0 0.0
    %252 = vmatpush1.msra.mxu0 0.0
    %253 = vmatprep.subr.mxu0 0.0
    %254 = vmatpush1.msra.mxu0 0.0
    %255 = vmatprep.subr.mxu0 0.0
    %256 = vmatpush1.msra.mxu0 0.0
    %257 = vmatprep.subr.mxu0 0.0
    %258 = vmatpush1.msra.mxu0 0.0
    %259 = vmatprep.subr.mxu0 0.0
    %260 = vmatpush1.msra.mxu0 0.0
    %261 = vmatprep.subr.mxu0 0.0
    %262 = vmatpush1.msra.mxu0 0.0
    %263 = vmatprep.subr.mxu0 0.0
    %264 = vmatpush1.msra.mxu0 0.0
    %265 = vmatprep.subr.mxu0 0.0
    %266 = vmatpush1.msra.mxu0 0.0
    %267 = vmatprep.subr.mxu0 0.0
    %268 = vmatpush1.msra.mxu0 0.0
    %269 = vmatprep.subr.mxu0 0.0
    %270 = vmatpush1.msra.mxu0 0.0
    %271 = vmatprep.subr.mxu0 0.0
    %272 = vmatpush1.msra.mxu0 0.0
    %273 = vmatprep.subr.mxu0 0.0
    %274 = vmatpush1.msra.mxu0 0.0
    %275 = vmatprep.subr.mxu0 0.0
    %276 = vmatpush1.msra.mxu0 0.0
    %277 = vmatprep.subr.mxu0 0.0
    %278 = vmatpush1.msra.mxu0 0.0
    %279 = vmatprep.subr.mxu0 0.0
    %280 = vmatpush1.msra.mxu0 0.0
    %281 = vmatprep.mubr.f32.mxu0 0.0
    %282 = vmatmul.mubr.f32.gmra.mrb[0].mxu0 %v215
    %v283 = vpop.f32.mrb[0].mxu0
    %v284 = vadd.f32 0.0, %v283
    %v285 = vpop.f32.mrb[0].mxu0
    %v286 = vadd.f32 0.0, %v285
    %287 = vdwg.mxu0
    %288 = vmatprep.subr.mxu0 %v104
    %289 = vmatpush1.msra.mxu0 %v103
    %290 = vmatprep.subr.mxu0 %v108
    %291 = vmatpush1.msra.mxu0 %v107
    %292 = vmatprep.subr.mxu0 %v112
    %293 = vmatpush1.msra.mxu0 %v111
    %294 = vmatprep.subr.mxu0 %v116
    %295 = vmatpush1.msra.mxu0 %v115
    %296 = vmatprep.subr.mxu0 0.0
    %297 = vmatpush1.msra.mxu0 0.0
    %298 = vmatprep.subr.mxu0 0.0
    %299 = vmatpush1.msra.mxu0 0.0
    %300 = vmatprep.subr.mxu0 0.0
    %301 = vmatpush1.msra.mxu0 0.0
    %302 = vmatprep.subr.mxu0 0.0
    %303 = vmatpush1.msra.mxu0 0.0
    %304 = vmatprep.subr.mxu0 0.0
    %305 = vmatpush1.msra.mxu0 0.0
    %306 = vmatprep.subr.mxu0 0.0
    %307 = vmatpush1.msra.mxu0 0.0
    %308 = vmatprep.subr.mxu0 0.0
    %309 = vmatpush1.msra.mxu0 0.0
    %310 = vmatprep.subr.mxu0 0.0
    %311 = vmatpush1.msra.mxu0 0.0
    %312 = vmatprep.subr.mxu0 0.0
    %313 = vmatpush1.msra.mxu0 0.0
    %314 = vmatprep.subr.mxu0 0.0
    %315 = vmatpush1.msra.mxu0 0.0
    %316 = vmatprep.subr.mxu0 0.0
    %317 = vmatpush1.msra.mxu0 0.0
    %318 = vmatprep.subr.mxu0 0.0
    %319 = vmatpush1.msra.mxu0 0.0
    %320 = vmatprep.subr.mxu0 0.0
    %321 = vmatpush1.msra.mxu0 0.0
    %322 = vmatprep.subr.mxu0 0.0
    %323 = vmatpush1.msra.mxu0 0.0
    %324 = vmatprep.subr.mxu0 0.0
    %325 = vmatpush1.msra.mxu0 0.0
    %326 = vmatprep.subr.mxu0 0.0
    %327 = vmatpush1.msra.mxu0 0.0
    %328 = vmatprep.subr.mxu0 0.0
    %329 = vmatpush1.msra.mxu0 0.0
    %330 = vmatprep.subr.mxu0 0.0
    %331 = vmatpush1.msra.mxu0 0.0
    %332 = vmatprep.subr.mxu0 0.0
    %333 = vmatpush1.msra.mxu0 0.0
    %334 = vmatprep.subr.mxu0 0.0
    %335 = vmatpush1.msra.mxu0 0.0
    %336 = vmatprep.subr.mxu0 0.0
    %337 = vmatpush1.msra.mxu0 0.0
    %338 = vmatprep.subr.mxu0 0.0
    %339 = vmatpush1.msra.mxu0 0.0
    %340 = vmatprep.subr.mxu0 0.0
    %341 = vmatpush1.msra.mxu0 0.0
    %342 = vmatprep.subr.mxu0 0.0
    %343 = vmatpush1.msra.mxu0 0.0
    %344 = vmatprep.subr.mxu0 0.0
    %345 = vmatpush1.msra.mxu0 0.0
    %346 = vmatprep.subr.mxu0 0.0
    %347 = vmatpush1.msra.mxu0 0.0
    %348 = vmatprep.subr.mxu0 0.0
    %349 = vmatpush1.msra.mxu0 0.0
    %350 = vmatprep.subr.mxu0 0.0
    %351 = vmatpush1.msra.mxu0 0.0
    %352 = vmatprep.mubr.f32.mxu0 0.0
    %353 = vmatmul.mubr.f32.gmra.mrb[0].mxu0 %v215
    %v354 = vpop.f32.mrb[0].mxu0
    %v355 = vadd.f32 0.0, %v354
    %v356 = vpop.f32.mrb[0].mxu0
    %v357 = vadd.f32 0.0, %v356
    %358 = vdwg.mxu0
    %v360 = vsel %vm213, %v210, 0
    %362 = vmatprep.subr.mxu0 %v86
    %363 = vmatpush1.msra.mxu0 %v85
    %364 = vmatprep.subr.mxu0 %v90
    %365 = vmatpush1.msra.mxu0 %v89
    %366 = vmatprep.subr.mxu0 %v94
    %367 = vmatpush1.msra.mxu0 %v93
    %368 = vmatprep.subr.mxu0 %v98
    %369 = vmatpush1.msra.mxu0 %v97
    %370 = vmatprep.subr.mxu0 0.0
    %371 = vmatpush1.msra.mxu0 0.0
    %372 = vmatprep.subr.mxu0 0.0
    %373 = vmatpush1.msra.mxu0 0.0
    %374 = vmatprep.subr.mxu0 0.0
    %375 = vmatpush1.msra.mxu0 0.0
    %376 = vmatprep.subr.mxu0 0.0
    %377 = vmatpush1.msra.mxu0 0.0
    %378 = vmatprep.subr.mxu0 0.0
    %379 = vmatpush1.msra.mxu0 0.0
    %380 = vmatprep.subr.mxu0 0.0
    %381 = vmatpush1.msra.mxu0 0.0
    %382 = vmatprep.subr.mxu0 0.0
    %383 = vmatpush1.msra.mxu0 0.0
    %384 = vmatprep.subr.mxu0 0.0
    %385 = vmatpush1.msra.mxu0 0.0
    %386 = vmatprep.subr.mxu0 0.0
    %387 = vmatpush1.msra.mxu0 0.0
    %388 = vmatprep.subr.mxu0 0.0
    %389 = vmatpush1.msra.mxu0 0.0
    %390 = vmatprep.subr.mxu0 0.0
    %391 = vmatpush1.msra.mxu0 0.0
    %392 = vmatprep.subr.mxu0 0.0
    %393 = vmatpush1.msra.mxu0 0.0
    %394 = vmatprep.subr.mxu0 0.0
    %395 = vmatpush1.msra.mxu0 0.0
    %396 = vmatprep.subr.mxu0 0.0
    %397 = vmatpush1.msra.mxu0 0.0
    %398 = vmatprep.subr.mxu0 0.0
    %399 = vmatpush1.msra.mxu0 0.0
    %400 = vmatprep.subr.mxu0 0.0
    %401 = vmatpush1.msra.mxu0 0.0
    %402 = vmatprep.subr.mxu0 0.0
    %403 = vmatpush1.msra.mxu0 0.0
    %404 = vmatprep.subr.mxu0 0.0
    %405 = vmatpush1.msra.mxu0 0.0
    %406 = vmatprep.subr.mxu0 0.0
    %407 = vmatpush1.msra.mxu0 0.0
    %408 = vmatprep.subr.mxu0 0.0
    %409 = vmatpush1.msra.mxu0 0.0
    %410 = vmatprep.subr.mxu0 0.0
    %411 = vmatpush1.msra.mxu0 0.0
    %412 = vmatprep.subr.mxu0 0.0
    %413 = vmatpush1.msra.mxu0 0.0
    %414 = vmatprep.subr.mxu0 0.0
    %415 = vmatpush1.msra.mxu0 0.0
    %416 = vmatprep.subr.mxu0 0.0
    %417 = vmatpush1.msra.mxu0 0.0
    %418 = vmatprep.subr.mxu0 0.0
    %419 = vmatpush1.msra.mxu0 0.0
    %420 = vmatprep.subr.mxu0 0.0
    %421 = vmatpush1.msra.mxu0 0.0
    %422 = vmatprep.subr.mxu0 0.0
    %423 = vmatpush1.msra.mxu0 0.0
    %424 = vmatprep.subr.mxu0 0.0
    %425 = vmatpush1.msra.mxu0 0.0
    %426 = vmatprep.mubr.f32.mxu0 0.0
    %427 = vmatmul.mubr.f32.gmra.mrb[0].mxu0 %v360
    %v428 = vpop.f32.mrb[0].mxu0
    %v429 = vadd.f32 %v284, %v428
    %v430 = vpop.f32.mrb[0].mxu0
    %v431 = vadd.f32 %v286, %v430
    %432 = vdwg.mxu0
    %433 = vmatprep.subr.mxu0 %v88
    %434 = vmatpush1.msra.mxu0 %v87
    %435 = vmatprep.subr.mxu0 %v92
    %436 = vmatpush1.msra.mxu0 %v91
    %437 = vmatprep.subr.mxu0 %v96
    %438 = vmatpush1.msra.mxu0 %v95
    %439 = vmatprep.subr.mxu0 %v100
    %440 = vmatpush1.msra.mxu0 %v99
    %441 = vmatprep.subr.mxu0 0.0
    %442 = vmatpush1.msra.mxu0 0.0
    %443 = vmatprep.subr.mxu0 0.0
    %444 = vmatpush1.msra.mxu0 0.0
    %445 = vmatprep.subr.mxu0 0.0
    %446 = vmatpush1.msra.mxu0 0.0
    %447 = vmatprep.subr.mxu0 0.0
    %448 = vmatpush1.msra.mxu0 0.0
    %449 = vmatprep.subr.mxu0 0.0
    %450 = vmatpush1.msra.mxu0 0.0
    %451 = vmatprep.subr.mxu0 0.0
    %452 = vmatpush1.msra.mxu0 0.0
    %453 = vmatprep.subr.mxu0 0.0
    %454 = vmatpush1.msra.mxu0 0.0
    %455 = vmatprep.subr.mxu0 0.0
    %456 = vmatpush1.msra.mxu0 0.0
    %457 = vmatprep.subr.mxu0 0.0
    %458 = vmatpush1.msra.mxu0 0.0
    %459 = vmatprep.subr.mxu0 0.0
    %460 = vmatpush1.msra.mxu0 0.0
    %461 = vmatprep.subr.mxu0 0.0
    %462 = vmatpush1.msra.mxu0 0.0
    %463 = vmatprep.subr.mxu0 0.0
    %464 = vmatpush1.msra.mxu0 0.0
    %465 = vmatprep.subr.mxu0 0.0
    %466 = vmatpush1.msra.mxu0 0.0
    %467 = vmatprep.subr.mxu0 0.0
    %468 = vmatpush1.msra.mxu0 0.0
    %469 = vmatprep.subr.mxu0 0.0
    %470 = vmatpush1.msra.mxu0 0.0
    %471 = vmatprep.subr.mxu0 0.0
    %472 = vmatpush1.msra.mxu0 0.0
    %473 = vmatprep.subr.mxu0 0.0
    %474 = vmatpush1.msra.mxu0 0.0
    %475 = vmatprep.subr.mxu0 0.0
    %476 = vmatpush1.msra.mxu0 0.0
    %477 = vmatprep.subr.mxu0 0.0
    %478 = vmatpush1.msra.mxu0 0.0
    %479 = vmatprep.subr.mxu0 0.0
    %480 = vmatpush1.msra.mxu0 0.0
    %481 = vmatprep.subr.mxu0 0.0
    %482 = vmatpush1.msra.mxu0 0.0
    %483 = vmatprep.subr.mxu0 0.0
    %484 = vmatpush1.msra.mxu0 0.0
    %485 = vmatprep.subr.mxu0 0.0
    %486 = vmatpush1.msra.mxu0 0.0
    %487 = vmatprep.subr.mxu0 0.0
    %488 = vmatpush1.msra.mxu0 0.0
    %489 = vmatprep.subr.mxu0 0.0
    %490 = vmatpush1.msra.mxu0 0.0
    %491 = vmatprep.subr.mxu0 0.0
    %492 = vmatpush1.msra.mxu0 0.0
    %493 = vmatprep.subr.mxu0 0.0
    %494 = vmatpush1.msra.mxu0 0.0
    %495 = vmatprep.subr.mxu0 0.0
    %496 = vmatpush1.msra.mxu0 0.0
    %497 = vmatprep.mubr.f32.mxu0 0.0
    %498 = vmatmul.mubr.f32.gmra.mrb[0].mxu0 %v360
    %v499 = vpop.f32.mrb[0].mxu0
    %v500 = vadd.f32 %v355, %v499
    %v501 = vpop.f32.mrb[0].mxu0
    %v502 = vadd.f32 %v357, %v501
    %503 = vdwg.mxu0
    %v505 = vlaneseq
    %v506 = vshrl.u32 %v505, 7
    %v507 = vsub.s32 0, %v506
    %v508 = vrot.slane %v133, %v507
    %v509 = vlaneseq
    %v510 = vshrl.u32 %v509, 7
    %v511 = vsub.s32 1, %v510
    %v512 = vrot.slane %v133, %v511
    %v513 = vlaneseq
    %v514 = vshrl.u32 %v513, 7
    %v515 = vsub.s32 2, %v514
    %v516 = vrot.slane %v133, %v515
    %v517 = vlaneseq
    %v518 = vshrl.u32 %v517, 7
    %v519 = vsub.s32 3, %v518
    %v520 = vrot.slane %v133, %v519
    %v525 = vadd.f32 %v429, %v508
    %v526 = vadd.f32 %v431, %v512
    %v527 = vadd.f32 %v500, %v516
    %v528 = vadd.f32 %v502, %v520
    %v530 = vsel %vm213, %v68, 0
    %532 = vmatprep.subr.mxu0 %v118
    %533 = vmatpush1.msra.mxu0 %v117
    %534 = vmatprep.subr.mxu0 %v121
    %535 = vmatpush1.msra.mxu0 %v120
    %536 = vmatprep.subr.mxu0 %v124
    %537 = vmatpush1.msra.mxu0 %v123
    %538 = vmatprep.subr.mxu0 %v127
    %539 = vmatpush1.msra.mxu0 %v126
    %540 = vmatprep.subr.mxu0 0.0
    %541 = vmatpush1.msra.mxu0 0.0
    %542 = vmatprep.subr.mxu0 0.0
    %543 = vmatpush1.msra.mxu0 0.0
    %544 = vmatprep.subr.mxu0 0.0
    %545 = vmatpush1.msra.mxu0 0.0
    %546 = vmatprep.subr.mxu0 0.0
    %547 = vmatpush1.msra.mxu0 0.0
    %548 = vmatprep.subr.mxu0 0.0
    %549 = vmatpush1.msra.mxu0 0.0
    %550 = vmatprep.subr.mxu0 0.0
    %551 = vmatpush1.msra.mxu0 0.0
    %552 = vmatprep.subr.mxu0 0.0
    %553 = vmatpush1.msra.mxu0 0.0
    %554 = vmatprep.subr.mxu0 0.0
    %555 = vmatpush1.msra.mxu0 0.0
    %556 = vmatprep.subr.mxu0 0.0
    %557 = vmatpush1.msra.mxu0 0.0
    %558 = vmatprep.subr.mxu0 0.0
    %559 = vmatpush1.msra.mxu0 0.0
    %560 = vmatprep.subr.mxu0 0.0
    %561 = vmatpush1.msra.mxu0 0.0
    %562 = vmatprep.subr.mxu0 0.0
    %563 = vmatpush1.msra.mxu0 0.0
    %564 = vmatprep.subr.mxu0 0.0
    %565 = vmatpush1.msra.mxu0 0.0
    %566 = vmatprep.subr.mxu0 0.0
    %567 = vmatpush1.msra.mxu0 0.0
    %568 = vmatprep.subr.mxu0 0.0
    %569 = vmatpush1.msra.mxu0 0.0
    %570 = vmatprep.subr.mxu0 0.0
    %571 = vmatpush1.msra.mxu0 0.0
    %572 = vmatprep.subr.mxu0 0.0
    %573 = vmatpush1.msra.mxu0 0.0
    %574 = vmatprep.subr.mxu0 0.0
    %575 = vmatpush1.msra.mxu0 0.0
    %576 = vmatprep.subr.mxu0 0.0
    %577 = vmatpush1.msra.mxu0 0.0
    %578 = vmatprep.subr.mxu0 0.0
    %579 = vmatpush1.msra.mxu0 0.0
    %580 = vmatprep.subr.mxu0 0.0
    %581 = vmatpush1.msra.mxu0 0.0
    %582 = vmatprep.subr.mxu0 0.0
    %583 = vmatpush1.msra.mxu0 0.0
    %584 = vmatprep.subr.mxu0 0.0
    %585 = vmatpush1.msra.mxu0 0.0
    %586 = vmatprep.subr.mxu0 0.0
    %587 = vmatpush1.msra.mxu0 0.0
    %588 = vmatprep.subr.mxu0 0.0
    %589 = vmatpush1.msra.mxu0 0.0
    %590 = vmatprep.subr.mxu0 0.0
    %591 = vmatpush1.msra.mxu0 0.0
    %592 = vmatprep.subr.mxu0 0.0
    %593 = vmatpush1.msra.mxu0 0.0
    %594 = vmatprep.subr.mxu0 0.0
    %595 = vmatpush1.msra.mxu0 0.0
    %596 = vmatprep.mubr.f32.mxu0 0.0
    %597 = vmatmul.mubr.f32.gmra.mrb[0].mxu0 %v530
    %v598 = vpop.f32.mrb[0].mxu0
    %v599 = vadd.f32 0.0, %v598
    %v600 = vpop.f32.mrb[0].mxu0
    %v601 = vadd.f32 0.0, %v600
    %602 = vdwg.mxu0
    %603 = vmatprep.subr.mxu0 0.0
    %604 = vmatpush1.msra.mxu0 %v119
    %605 = vmatprep.subr.mxu0 0.0
    %606 = vmatpush1.msra.mxu0 %v122
    %607 = vmatprep.subr.mxu0 0.0
    %608 = vmatpush1.msra.mxu0 %v125
    %609 = vmatprep.subr.mxu0 0.0
    %610 = vmatpush1.msra.mxu0 %v128
    %611 = vmatprep.subr.mxu0 0.0
    %612 = vmatpush1.msra.mxu0 0.0
    %613 = vmatprep.subr.mxu0 0.0
    %614 = vmatpush1.msra.mxu0 0.0
    %615 = vmatprep.subr.mxu0 0.0
    %616 = vmatpush1.msra.mxu0 0.0
    %617 = vmatprep.subr.mxu0 0.0
    %618 = vmatpush1.msra.mxu0 0.0
    %619 = vmatprep.subr.mxu0 0.0
    %620 = vmatpush1.msra.mxu0 0.0
    %621 = vmatprep.subr.mxu0 0.0
    %622 = vmatpush1.msra.mxu0 0.0
    %623 = vmatprep.subr.mxu0 0.0
    %624 = vmatpush1.msra.mxu0 0.0
    %625 = vmatprep.subr.mxu0 0.0
    %626 = vmatpush1.msra.mxu0 0.0
    %627 = vmatprep.subr.mxu0 0.0
    %628 = vmatpush1.msra.mxu0 0.0
    %629 = vmatprep.subr.mxu0 0.0
    %630 = vmatpush1.msra.mxu0 0.0
    %631 = vmatprep.subr.mxu0 0.0
    %632 = vmatpush1.msra.mxu0 0.0
    %633 = vmatprep.subr.mxu0 0.0
    %634 = vmatpush1.msra.mxu0 0.0
    %635 = vmatprep.subr.mxu0 0.0
    %636 = vmatpush1.msra.mxu0 0.0
    %637 = vmatprep.subr.mxu0 0.0
    %638 = vmatpush1.msra.mxu0 0.0
    %639 = vmatprep.subr.mxu0 0.0
    %640 = vmatpush1.msra.mxu0 0.0
    %641 = vmatprep.subr.mxu0 0.0
    %642 = vmatpush1.msra.mxu0 0.0
    %643 = vmatprep.subr.mxu0 0.0
    %644 = vmatpush1.msra.mxu0 0.0
    %645 = vmatprep.subr.mxu0 0.0
    %646 = vmatpush1.msra.mxu0 0.0
    %647 = vmatprep.subr.mxu0 0.0
    %648 = vmatpush1.msra.mxu0 0.0
    %649 = vmatprep.subr.mxu0 0.0
    %650 = vmatpush1.msra.mxu0 0.0
    %651 = vmatprep.subr.mxu0 0.0
    %652 = vmatpush1.msra.mxu0 0.0
    %653 = vmatprep.subr.mxu0 0.0
    %654 = vmatpush1.msra.mxu0 0.0
    %655 = vmatprep.subr.mxu0 0.0
    %656 = vmatpush1.msra.mxu0 0.0
    %657 = vmatprep.subr.mxu0 0.0
    %658 = vmatpush1.msra.mxu0 0.0
    %659 = vmatprep.subr.mxu0 0.0
    %660 = vmatpush1.msra.mxu0 0.0
    %661 = vmatprep.subr.mxu0 0.0
    %662 = vmatpush1.msra.mxu0 0.0
    %663 = vmatprep.subr.mxu0 0.0
    %664 = vmatpush1.msra.mxu0 0.0
    %665 = vmatprep.subr.mxu0 0.0
    %666 = vmatpush1.msra.mxu0 0.0
    %667 = vmatprep.mubr.f32.mxu0 0.0
    %668 = vmatmul.mubr.f32.gmra.mrb[0].mxu0 %v530
    %v669 = vpop.f32.mrb[0].mxu0
    %v670 = vadd.f32 0.0, %v669
    %v671 = vpop.f32.mrb[0].mxu0
    %672 = vdwg.mxu0
    %v673 = vadd.f32 %v525, %v599
    %v674 = vxor.u32 %v673, 2147483648
    %v675 = vmul.f32 %v674, 1.442695
    %v676 = vpow.pop %v675
    %v677 = vadd.f32 %v676, 1.0
    %v678 = vrcp.pop %v677
    %v679 = vmul.f32 1.0, %v678
    %v680 = vadd.f32 %v526, %v601
    %v681 = vxor.u32 %v680, 2147483648
    %v682 = vmul.f32 %v681, 1.442695
    %v683 = vpow.pop %v682
    %v684 = vadd.f32 %v683, 1.0
    %v685 = vrcp.pop %v684
    %v686 = vmul.f32 1.0, %v685
    %v688 = vlaneseq
    %v689 = vshrl.u32 %v688, 7
    %v690 = vsub.s32 0, %v689
    %v691 = vrot.slane %v134, %v690
    %v693 = vadd.f32 %v670, %v691
    %v694 = vmul.f32 %v679, %v693
    %v695 = vadd.f32 %v527, %v694
    %v696 = vtanh.pop %v695
    %v697 = vsub.f32 1.0, %v686
    %v698 = vmul.f32 %v697, %v696
    %v699 = vmul.f32 %v686, %v68
    %v700 = vadd.f32 %v698, %v699
    %v702 = vsel %vm213, %v700, 0
    %704 = vmatprep.subr.mxu0 0.0
    %705 = vmatpush1.msra.mxu0 %v129
    %706 = vmatprep.subr.mxu0 0.0
    %707 = vmatpush1.msra.mxu0 %v130
    %708 = vmatprep.subr.mxu0 0.0
    %709 = vmatpush1.msra.mxu0 %v131
    %710 = vmatprep.subr.mxu0 0.0
    %711 = vmatpush1.msra.mxu0 %v132
    %712 = vmatprep.subr.mxu0 0.0
    %713 = vmatpush1.msra.mxu0 0.0
    %714 = vmatprep.subr.mxu0 0.0
    %715 = vmatpush1.msra.mxu0 0.0
    %716 = vmatprep.subr.mxu0 0.0
    %717 = vmatpush1.msra.mxu0 0.0
    %718 = vmatprep.subr.mxu0 0.0
    %719 = vmatpush1.msra.mxu0 0.0
    %720 = vmatprep.subr.mxu0 0.0
    %721 = vmatpush1.msra.mxu0 0.0
    %722 = vmatprep.subr.mxu0 0.0
    %723 = vmatpush1.msra.mxu0 0.0
    %724 = vmatprep.subr.mxu0 0.0
    %725 = vmatpush1.msra.mxu0 0.0
    %726 = vmatprep.subr.mxu0 0.0
    %727 = vmatpush1.msra.mxu0 0.0
    %728 = vmatprep.subr.mxu0 0.0
    %729 = vmatpush1.msra.mxu0 0.0
    %730 = vmatprep.subr.mxu0 0.0
    %731 = vmatpush1.msra.mxu0 0.0
    %732 = vmatprep.subr.mxu0 0.0
    %733 = vmatpush1.msra.mxu0 0.0
    %734 = vmatprep.subr.mxu0 0.0
    %735 = vmatpush1.msra.mxu0 0.0
    %736 = vmatprep.subr.mxu0 0.0
    %737 = vmatpush1.msra.mxu0 0.0
    %738 = vmatprep.subr.mxu0 0.0
    %739 = vmatpush1.msra.mxu0 0.0
    %740 = vmatprep.subr.mxu0 0.0
    %741 = vmatpush1.msra.mxu0 0.0
    %742 = vmatprep.subr.mxu0 0.0
    %743 = vmatpush1.msra.mxu0 0.0
    %744 = vmatprep.subr.mxu0 0.0
    %745 = vmatpush1.msra.mxu0 0.0
    %746 = vmatprep.subr.mxu0 0.0
    %747 = vmatpush1.msra.mxu0 0.0
    %748 = vmatprep.subr.mxu0 0.0
    %749 = vmatpush1.msra.mxu0 0.0
    %750 = vmatprep.subr.mxu0 0.0
    %751 = vmatpush1.msra.mxu0 0.0
    %752 = vmatprep.subr.mxu0 0.0
    %753 = vmatpush1.msra.mxu0 0.0
    %754 = vmatprep.subr.mxu0 0.0
    %755 = vmatpush1.msra.mxu0 0.0
    %756 = vmatprep.subr.mxu0 0.0
    %757 = vmatpush1.msra.mxu0 0.0
    %758 = vmatprep.subr.mxu0 0.0
    %759 = vmatpush1.msra.mxu0 0.0
    %760 = vmatprep.subr.mxu0 0.0
    %761 = vmatpush1.msra.mxu0 0.0
    %762 = vmatprep.subr.mxu0 0.0
    %763 = vmatpush1.msra.mxu0 0.0
    %764 = vmatprep.subr.mxu0 0.0
    %765 = vmatpush1.msra.mxu0 0.0
    %766 = vmatprep.subr.mxu0 0.0
    %767 = vmatpush1.msra.mxu0 0.0
    %768 = vmatprep.mubr.f32.mxu0 0.0
    %769 = vmatmul.mubr.f32.gmra.mrb[0].mxu0 %v702
    %v770 = vpop.f32.mrb[0].mxu0
    %v771 = vadd.f32 0.0, %v770
    %v772 = vpop.f32.mrb[0].mxu0
    %773 = vdwg.mxu0
    %v774 = vadd.f32 %v528, %v771
    %775 = vst [vmem:[#allocation7] sm:$0xff] %v774
    %776 = vst.msk [vmem:[%s11] sm:$0xff] %vm213, %v700
    // Predicated region
    $region50: #{decoder_forward.1} parent=1 // pred_check
      _
    $region51: #{decoder_forward.1} parent=1 // pred_check_branch
      %778 = sbr.rel (0) target = $region53
    $region52: #{decoder_forward.1} parent=1 // pred_region
      %s780 = ssub.s32 128, 128
      %781 = vsyncadd [#allocation4], %s780
      %s783 = sshll.u32 [#allocation7], 4
      %s784 = int_to_ptr.vmem [resolvable:$true] %s783
      %786 = dma.vmem_to_hbm [thread:$0]  %s784, 128, %s10, [#allocation4]
    $region53: #{decoder_forward.1} parent=1 // pred_fallthru
      _
    // Predicated region
    $region54: #{decoder_forward.1} parent=1 // pred_check
      _
    $region55: #{decoder_forward.1} parent=1 // pred_check_branch
      %788 = sbr.rel (0) target = $region57
    $region56: #{decoder_forward.1} parent=1 // pred_region
      _
    $region57: #{decoder_forward.1} parent=1 // pred_fallthru
      _
    // Predicated region
    $region58: #{decoder_forward.1} parent=1 // pred_check
      _
    $region59: #{decoder_forward.1} parent=1 // pred_check_branch
      %790 = sbr.rel (0) target = $region61
    $region60: #{decoder_forward.1} parent=1 // pred_region
      %791 = dma.done [#allocation4], 128
    $region61: #{decoder_forward.1} parent=1 // pred_fallthru
      _
    // Predicated region
    $region62: #{decoder_forward.1} parent=1 // pred_check
      _
    $region63: #{decoder_forward.1} parent=1 // pred_check_branch
      %793 = sbr.rel (0) target = $region65
    $region64: #{decoder_forward.1} parent=1 // pred_region
      _
    $region65: #{decoder_forward.1} parent=1 // pred_fallthru
      _
    %794 = vsyncpa [#allocation3], 1
    %795 = vsyncpa [#allocation6], 1
    %796 = vsyncpa [#allocation4], 1

</llo_original>
